<compile_context>
chip_gen: v7x
topology: tpu7x:2x2x1
jax: 0.10.0
libtpu: 0.0.40
codegen_flags: <defaults>
</compile_context>

<pallas_src>
import math

import jax
import jax.numpy as jnp
from jax.experimental import pallas as pl
from jax.experimental.pallas import tpu as pltpu


def _l2_normalize_kernel(x_ref, o_ref):
    # x_ref: (tb, C, tm)  -- C on the sublane axis, tm (lane-dense) on lanes.
    x = x_ref[...].astype(jnp.float32)
    sumsq = jnp.sum(x * x, axis=1, keepdims=True)      # (tb, 1, tm), sublane reduce
    qn = jnp.sqrt(sumsq) + 1e-12                       # matches torch.norm(...)+1e-12
    o_ref[...] = (x / qn).astype(o_ref.dtype)


def _largest_divisor_leq(n, limit):
    limit = max(1, min(n, limit))
    best = 1
    d = 1
    while d * d <= n:
        if n % d == 0:
            if d <= limit:
                best = max(best, d)
            q = n // d
            if q <= limit:
                best = max(best, q)
        d += 1
    return best


def normalize(x, *, block_budget_bytes=2 * 1024 * 1024):
    """Pallas TPU equivalent of Normalize.forward: x / (||x||_2 over dim=1 + 1e-12)."""
    orig_shape = x.shape
    assert x.ndim >= 2, "Normalize expects at least 2 dims (dim=1 is reduced)"
    B, C = int(orig_shape[0]), int(orig_shape[1])
    M = int(math.prod(orig_shape[2:]))                 # flattened spatial (1 if 2-D input)
    x3 = x.reshape(B, C, M)                            # free, row-major reshape

    itemsize = jnp.dtype(x.dtype).itemsize

    # Lane tile: a multiple of 128 that divides M (or the full extent if M is
    # not 128-aligned -- allowed since it equals the full array dim).
    if M % 128 == 0:
        max_tm_lanes = max(1, block_budget_bytes // max(1, C * itemsize) // 128)
        tm = 128 * _largest_divisor_leq(M // 128, max_tm_lanes)
    else:
        tm = M

    # Batch tile: largest divisor of B keeping the block under budget.
    per_b_bytes = C * tm * itemsize
    tb = _largest_divisor_leq(B, max(1, block_budget_bytes // max(1, per_b_bytes)))

    grid = (B // tb, M // tm)

    out = pl.pallas_call(
        _l2_normalize_kernel,
        out_shape=jax.ShapeDtypeStruct((B, C, M), x.dtype),
        grid_spec=pltpu.PrefetchScalarGridSpec(
            num_scalar_prefetch=0,
            grid=grid,
            in_specs=[pl.BlockSpec((tb, C, tm), lambda i, j: (i, 0, j))],
            out_specs=pl.BlockSpec((tb, C, tm), lambda i, j: (i, 0, j)),
        ),
        compiler_params=pltpu.CompilerParams(
            dimension_semantics=("parallel", "parallel")),
    )(x3)
    return out.reshape(orig_shape)


def _reference(x):
    qn = jnp.sqrt(jnp.sum(x.astype(jnp.float32) ** 2, axis=1, keepdims=True)) + 1e-12
    return (x.astype(jnp.float32) / qn).astype(x.dtype)


if __name__ == "__main__":
    key = jax.random.PRNGKey(0)
    k1, k2, k3 = jax.random.split(key, 3)

    # 4-D case implied by the module (dim=1 = channels): [B, C, H, W]
    x4 = jax.random.normal(k1, (2, 4, 16, 16), dtype=jnp.float32)
    y4 = jax.block_until_ready(normalize(x4))
    assert jnp.allclose(y4, _reference(x4), rtol=1e-5, atol=1e-5)

    # 3-D case with a lane-tiled last axis (exercises the tiling heuristic)
    x3 = jax.random.normal(k2, (3, 5, 384), dtype=jnp.float32)
    y3 = jax.block_until_ready(normalize(x3))
    assert jnp.allclose(y3, _reference(x3), rtol=1e-5, atol=1e-5)

    # 2-D case (feature normalization): [N, D] -> M == 1 fallback path
    x2 = jax.random.normal(k3, (8, 32), dtype=jnp.float32)
    y2 = jax.block_until_ready(normalize(x2))
    assert jnp.allclose(y2, _reference(x2), rtol=1e-5, atol=1e-5)

    print("KERNEL_OK")
</pallas_src>

<mosaic_0001>
module attributes {stable_mosaic.version = 11 : i64} {
  func.func @_l2_normalize_kernel(%arg0: i32, %arg1: i32, %arg2: memref<2x4x256xf32, #tpu.memory_space<vmem>>, %arg3: memref<2x4x256xf32, #tpu.memory_space<vmem>>) attributes {dimension_semantics = [#tpu.dimension_semantics<parallel>, #tpu.dimension_semantics<parallel>], iteration_bounds = array<i64: 1, 1>, scalar_prefetch = 0 : i64, scratch_operands = 0 : i64, tpu.core_type = #tpu.core_type<tc>, window_params = [{transform_indices = @transform_0, window_bounds = array<i64: 2, 4, 256>}, {transform_indices = @transform_1, window_bounds = array<i64: 2, 4, 256>}]} {
    %c0 = arith.constant 0 : index
    %c0_0 = arith.constant 0 : index
    %c0_1 = arith.constant 0 : index
    %0 = vector.load %arg2[%c0, %c0_0, %c0_1] : memref<2x4x256xf32, #tpu.memory_space<vmem>>, vector<2x4x256xf32>
    %1 = arith.mulf %0, %0 : vector<2x4x256xf32>
    %cst = arith.constant dense<0.000000e+00> : vector<2x256xf32>
    %2 = vector.multi_reduction <add>, %1, %cst [1] : vector<2x4x256xf32> to vector<2x256xf32>
    %3 = vector.shape_cast %2 : vector<2x256xf32> to vector<2x1x256xf32>
    %4 = math.sqrt %3 : vector<2x1x256xf32>
    %cst_2 = arith.constant 9.99999996E-13 : f32
    %5 = vector.broadcast %cst_2 : f32 to vector<2x1x256xf32>
    %6 = arith.addf %4, %5 : vector<2x1x256xf32>
    %7 = vector.broadcast %6 : vector<2x1x256xf32> to vector<2x4x256xf32>
    %8 = arith.divf %0, %7 : vector<2x4x256xf32>
    %c0_3 = arith.constant 0 : index
    %c0_4 = arith.constant 0 : index
    %c0_5 = arith.constant 0 : index
    %9 = vector.load %arg3[%c0_3, %c0_4, %c0_5] : memref<2x4x256xf32, #tpu.memory_space<vmem>>, vector<2x4x256xf32>
    tpu.vector_store %arg3[%c0_3, %c0_4, %c0_5], %8 {strides = array<i32>} : memref<2x4x256xf32, #tpu.memory_space<vmem>>, vector<2x4x256xf32>,
    return
  }
  func.func @transform_0(%arg0: i32, %arg1: i32) -> (i32, i32, i32) {
    %c0_i32 = arith.constant 0 : i32
    %c0_i32_0 = arith.constant 0 : i32
    return %arg0, %c0_i32, %arg1 : i32, i32, i32
  }
  func.func @transform_1(%arg0: i32, %arg1: i32) -> (i32, i32, i32) {
    %c0_i32 = arith.constant 0 : i32
    %c0_i32_0 = arith.constant 0 : i32
    return %arg0, %c0_i32, %arg1 : i32, i32, i32
  }
}

</mosaic_0001>

<llo_original>
// kernel: tpu_custom_call.1
$region0: #{tpu_custom_call.1}
  #allocation0 [shape = 'u32[]', space=smem, size = 0x4, offset = 0x4, fixed_abs, tag = 'smem constant byte address 0x4 - core index']
  #allocation1 [shape = 'u32[144,128]{1,0:T(1,128)}', space=vmem, size = 0x12000, scoped, tag = 'internal scratch']
  %s0 = inlined_call_operand.hbm [shape: f32[2,4,256], index: 0, kind: input, shape index: {}]
  %s1 = inlined_call_operand.hbm [shape: f32[2,4,256], index: 1, kind: output, shape index: {}]
  %s2 = sld [smem:[#allocation0]]
  $region18: #{tpu_custom_call.1} parent=0
    _
  %s4 = ssub.s32 1, %s2
  %s5 = scalar_select 0, %s4, %s2
  $region1: #{tpu_custom_call.1} parent=0
    #allocation2 [shape = 'u8[8192]{0}', space=vmem, size = 0x2000, scoped, tag = 'input window, operand 0, single buffered']
    #allocation3 [shape = 's32[1]{0}', space=sflag, size = 0x4, scoped, tag = 'scoped memory for tpu_custom_call.1']
    #allocation4 [shape = 's32[1]{0}', space=sflag, size = 0x4, scoped, tag = 'scoped memory for tpu_custom_call.1']
    #allocation5 [shape = 'u8[8192]{0}', space=vmem, size = 0x2000, scoped, tag = 'output window, operand 0, single buffered']
    %6 = vsyncpa [#allocation3], 0
    %7 = vsyncpa [#allocation4], 0
    // Predicated region
    $region2: #{tpu_custom_call.1} parent=1 // pred_check
      _
    $region3: #{tpu_custom_call.1} parent=1 // pred_check_branch
      %9 = sbr.rel (0) target = $region5
    $region4: #{tpu_custom_call.1} parent=1 // pred_region
      %s11 = ssub.s32 256, 256
      %12 = vsyncadd [#allocation3], %s11
      %s13 = sshll.u32 [#allocation2], 4
      %s14 = int_to_ptr.vmem [resolvable:$true] %s13
      %19 = dma.hbm_to_vmem [thread:$0]  %s0, 256, %s14, [#allocation3], 128, 128, 8
    $region5: #{tpu_custom_call.1} parent=1 // pred_fallthru
      _
    // Predicated region
    $region6: #{tpu_custom_call.1} parent=1 // pred_check
      _
    $region7: #{tpu_custom_call.1} parent=1 // pred_check_branch
      %21 = sbr.rel (0) target = $region9
    $region8: #{tpu_custom_call.1} parent=1 // pred_region
      %22 = dma.done [#allocation3], 256
    $region9: #{tpu_custom_call.1} parent=1 // pred_fallthru
      _
    %v23 = vld [vmem:[#allocation2] sm:$0xff]
    %v24 = vld [vmem:[#allocation2 + $0x8] sm:$0xff]
    %v25 = vmul.f32 %v23, %v23
    %v26 = vmul.f32 %v24, %v24
    %v29 = vcombine.high %v25, %v25
    %v30 = vcombine.high %v26, %v26
    %vm33 = vcmask 1043456
    %v34 = vsel %vm33, %v25, 0.0
    %v35 = vrot.slane %v34, 4
    %v36 = vadd.f32 %v34, %v35
    %v37 = vrot.slane %v36, 2
    %v38 = vadd.f32 %v36, %v37
    %v39 = vrot.slane %v38, 1
    %v40 = vadd.f32 %v38, %v39
    %v41 = vsel %vm33, %v29, 0.0
    %v42 = vrot.slane %v41, 4
    %v43 = vadd.f32 %v41, %v42
    %v44 = vrot.slane %v43, 2
    %v45 = vadd.f32 %v43, %v44
    %v46 = vrot.slane %v45, 1
    %v47 = vadd.f32 %v45, %v46
    %v48 = vsel %vm33, %v26, 0.0
    %v49 = vrot.slane %v48, 4
    %v50 = vadd.f32 %v48, %v49
    %v51 = vrot.slane %v50, 2
    %v52 = vadd.f32 %v50, %v51
    %v53 = vrot.slane %v52, 1
    %v54 = vadd.f32 %v52, %v53
    %v55 = vsel %vm33, %v30, 0.0
    %v56 = vrot.slane %v55, 4
    %v57 = vadd.f32 %v55, %v56
    %v58 = vrot.slane %v57, 2
    %v59 = vadd.f32 %v57, %v58
    %v60 = vrot.slane %v59, 1
    %v61 = vadd.f32 %v59, %v60
    %v62 = vrsqrt.pop %v40
    %v63 = vmul.f32 %v40, %v62
    %vm64 = vcmp.eq.f32.partialorder %v40, inf
    %v65 = vsel %vm64, %v40, %v63
    %vm66 = vcmp.eq.f32.partialorder %v40, 0.0
    %v67 = vand.u32 %v40, 2147483648
    %v68 = vsel %vm66, %v67, %v65
    %v69 = vrsqrt.pop %v47
    %v70 = vmul.f32 %v47, %v69
    %vm71 = vcmp.eq.f32.partialorder %v47, inf
    %v72 = vsel %vm71, %v47, %v70
    %vm73 = vcmp.eq.f32.partialorder %v47, 0.0
    %v74 = vand.u32 %v47, 2147483648
    %v75 = vsel %vm73, %v74, %v72
    %v76 = vrsqrt.pop %v54
    %v77 = vmul.f32 %v54, %v76
    %vm78 = vcmp.eq.f32.partialorder %v54, inf
    %v79 = vsel %vm78, %v54, %v77
    %vm80 = vcmp.eq.f32.partialorder %v54, 0.0
    %v81 = vand.u32 %v54, 2147483648
    %v82 = vsel %vm80, %v81, %v79
    %v83 = vrsqrt.pop %v61
    %v84 = vmul.f32 %v61, %v83
    %vm85 = vcmp.eq.f32.partialorder %v61, inf
    %v86 = vsel %vm85, %v61, %v84
    %vm87 = vcmp.eq.f32.partialorder %v61, 0.0
    %v88 = vand.u32 %v61, 2147483648
    %v89 = vsel %vm87, %v88, %v86
    %v90 = vadd.f32 %v68, 1e-12
    %v91 = vadd.f32 %v75, 1e-12
    %v92 = vadd.f32 %v82, 1e-12
    %v93 = vadd.f32 %v89, 1e-12
    %v98 = vcombine.low %v90, %v91
    %v99 = vcombine.low %v92, %v93
    %v102 = vrcp.pop %v98
    %v103 = vmul.f32 %v23, %v102
    %v104 = vrcp.pop %v99
    %v105 = vmul.f32 %v24, %v104
    %106 = vst [vmem:[#allocation5] sm:$0xff] %v103
    %107 = vst [vmem:[#allocation5 + $0x8] sm:$0xff] %v105
    // Predicated region
    $region10: #{tpu_custom_call.1} parent=1 // pred_check
      _
    $region11: #{tpu_custom_call.1} parent=1 // pred_check_branch
      %109 = sbr.rel (0) target = $region13
    $region12: #{tpu_custom_call.1} parent=1 // pred_region
      %s111 = ssub.s32 256, 256
      %112 = vsyncadd [#allocation4], %s111
      %s113 = sshll.u32 [#allocation5], 4
      %s114 = int_to_ptr.vmem [resolvable:$true] %s113
      %119 = dma.vmem_to_hbm [thread:$0]  %s114, 256, %s1, [#allocation4], 128, 128, 8
    $region13: #{tpu_custom_call.1} parent=1 // pred_fallthru
      _
    // Predicated region
    $region14: #{tpu_custom_call.1} parent=1 // pred_check
      _
    $region15: #{tpu_custom_call.1} parent=1 // pred_check_branch
      %121 = sbr.rel (0) target = $region17
    $region16: #{tpu_custom_call.1} parent=1 // pred_region
      %122 = dma.done [#allocation4], 256
    $region17: #{tpu_custom_call.1} parent=1 // pred_fallthru
      _
    %123 = vsyncpa [#allocation3], 1
    %124 = vsyncpa [#allocation4], 1

</llo_original>
